<compile_context>
chip_gen: v7x
topology: tpu7x:2x2x1
jax: 0.10.0
libtpu: 0.0.40
codegen_flags: <defaults>
</compile_context>

<pallas_src>
import jax
import jax.numpy as jnp
from jax.experimental import pallas as pl
from jax.experimental.pallas import tpu as pltpu


def _mlp_clamp_kernel(x_ref, bounds_ref,
                      w1_ref, b1_ref, w2_ref, b2_ref,
                      w3_ref, b3_ref, w4_ref, b4_ref,
                      out_ref):
    """Feature-major tiles (batch on the lane axis).

    x_ref      : (dim_io, TB)    f32
    bounds_ref : (2*dim_io, TB)  f32   rows [0:dim_io]=lower, [dim_io:]=upper
    w1_ref     : (dim_h, dim_io) f32   (layer 1 runs on the VPU)
    w2/w3_ref  : (dim_h, dim_h)  bf16  (MXU)
    w4_ref     : (dim_io, dim_h) bf16  (MXU)
    b*_ref     : (out, 1)        f32
    out_ref    : (dim_io, TB)    bf16 (or caller dtype)
    """
    dim_io = x_ref.shape[0]
    x = x_ref[...]                                   # (dim_io, TB) f32
    w1 = w1_ref[...]                                 # (dim_h, dim_io) f32

    # Layer 1 on the VPU: K = dim_io = 4 fills <2% of the MXU, so 4 broadcast
    # FMAs are cheaper than an MXU round-trip (and stay in f32).
    h = b1_ref[...] + w1[:, 0:1] * x[0:1, :]
    for k in range(1, dim_io):                       # static, tiny unroll
        h = h + w1[:, k:k + 1] * x[k:k + 1, :]
    h = jnp.maximum(h, 0.0)                          # (dim_h, TB) f32

    # Layers 2/3: 32x32 bf16 matmuls on the MXU, f32 accumulation.
    h = jnp.maximum(
        jnp.dot(w2_ref[...], h.astype(jnp.bfloat16),
                preferred_element_type=jnp.float32) + b2_ref[...], 0.0)
    h = jnp.maximum(
        jnp.dot(w3_ref[...], h.astype(jnp.bfloat16),
                preferred_element_type=jnp.float32) + b3_ref[...], 0.0)

    # Layer 4 (M = dim_io = 4) on the MXU.
    y = jnp.dot(w4_ref[...], h.astype(jnp.bfloat16),
                preferred_element_type=jnp.float32) + b4_ref[...]   # (dim_io, TB)

    # Fused clamp against the pre-merged bounds (no concatenate in-kernel).
    lower = bounds_ref[:dim_io, :]
    upper = bounds_ref[dim_io:, :]
    out_ref[...] = jnp.maximum(lower, jnp.minimum(upper, y)).astype(out_ref.dtype)


def model_constant_forward_fm(x_fm, bounds_fm, params, *, block_b=None,
                              out_dtype=jnp.bfloat16, vmem_limit_bytes=None):
    """Feature-major forward (preferred entry point).

    x_fm      : (dim_io, B) f32   (batch on the lane axis)
    bounds_fm : (2*dim_io, B) f32 rows [lower; upper] = [[r; s]; [R; S]]
    Returns   : (dim_io, B) out_dtype
    """
    w1, b1, w2, b2, w3, b3, w4, b4 = params
    dim_io, B = x_fm.shape
    dim_h = w1.shape[0]
    assert bounds_fm.shape == (2 * dim_io, B)

    # Single grid step by default (the problem is step-overhead bound); only
    # tile for very large batches with a lane-dense, evenly dividing tile.
    if (block_b is not None and block_b < B
            and B % block_b == 0 and block_b % 128 == 0):
        tb = block_b
    else:
        tb = B                               # whole batch in one block
    nb = pl.cdiv(B, tb)

    batch_spec = lambda nrows: pl.BlockSpec((nrows, tb), lambda i: (0, i))
    resident = lambda a: pl.BlockSpec(a.shape, lambda i: (0, 0))   # fetched once

    flops = 2 * B * (dim_io * dim_h + 2 * dim_h * dim_h + dim_h * dim_io)
    bytes_accessed = (
        x_fm.size * x_fm.dtype.itemsize
        + bounds_fm.size * bounds_fm.dtype.itemsize
        + B * dim_io * jnp.dtype(out_dtype).itemsize
        + sum(int(p.size) * p.dtype.itemsize for p in params))

    return pl.pallas_call(
        _mlp_clamp_kernel,
        out_shape=jax.ShapeDtypeStruct((dim_io, B), out_dtype),
        grid=(nb,),
        in_specs=[
            batch_spec(dim_io),              # x
            batch_spec(2 * dim_io),          # merged bounds: one sublane-full DMA
            resident(w1), resident(b1),
            resident(w2), resident(b2),
            resident(w3), resident(b3),
            resident(w4), resident(b4),
        ],
        out_specs=batch_spec(dim_io),
        compiler_params=pltpu.CompilerParams(
            dimension_semantics=("parallel",),
            vmem_limit_bytes=vmem_limit_bytes),
        cost_estimate=pl.CostEstimate(flops=flops, transcendentals=0,
                                      bytes_accessed=bytes_accessed),
    )(x_fm, bounds_fm, w1, b1, w2, b2, w3, b3, w4, b4)


def model_constant_forward(x, r, R, s, S, params, **kw):
    """PyTorch-module calling convention: x (B, dim_io); r,R (B, dim_y); s,S (B, dim_d).

    Layout plumbing only (one concat + two transposes); prefer the feature-major
    entry point `model_constant_forward_fm` in hot BSDE loops.
    """
    bounds_fm = jnp.concatenate((r, s, R, S), axis=-1).T     # (2*dim_io, B)
    out_fm = model_constant_forward_fm(x.T, bounds_fm, params, **kw)
    return out_fm.T                                          # (B, dim_io)


def init_params(key, dim_io, dim_h):
    """Mirrors the PyTorch module: kaiming_normal_ weights (fan_in, relu gain) and
    default nn.Linear uniform biases.  w1 kept in f32 (VPU layer); w2-w4 shipped
    as bf16 MXU inputs; biases f32, shaped (out, 1) for the feature-major layout.
    """
    # TODO(synk): bf16 weights for the 32x32/last layers deviate from the f32
    # PyTorch module; validate tolerance against the true f32 model if needed.
    def linear(k, fan_in, fan_out, wdtype):
        kw_, kb_ = jax.random.split(k)
        std = jnp.sqrt(2.0 / fan_in)
        w = (std * jax.random.normal(kw_, (fan_out, fan_in), jnp.float32)).astype(wdtype)
        bound = 1.0 / jnp.sqrt(fan_in)
        b = jax.random.uniform(kb_, (fan_out, 1), jnp.float32, -bound, bound)
        return w, b

    k1, k2, k3, k4 = jax.random.split(key, 4)
    w1, b1 = linear(k1, dim_io, dim_h, jnp.float32)
    w2, b2 = linear(k2, dim_h, dim_h, jnp.bfloat16)
    w3, b3 = linear(k3, dim_h, dim_h, jnp.bfloat16)
    w4, b4 = linear(k4, dim_h, dim_io, jnp.bfloat16)
    return (w1, b1, w2, b2, w3, b3, w4, b4)


if __name__ == "__main__":
    # Shapes consistent with the module: dim_y=2, dim_d=2, dim_h=32.  batch=256
    # is one lane-dense (128-multiple) tile -> a single grid step.
    dim_y, dim_d, dim_h, batch = 2, 2, 32, 256
    dim_io = dim_y + dim_d

    key = jax.random.PRNGKey(0)
    kp, kx, kl, ku = jax.random.split(key, 4)
    params = init_params(kp, dim_io, dim_h)

    # Feature-major inputs (batch on the lane axis), built directly: no wrapper
    # transposes in the hot path.
    x_fm = jax.random.normal(kx, (dim_io, batch), jnp.float32)
    lower_fm = -jnp.abs(jax.random.normal(kl, (dim_io, batch), jnp.float32))  # [r; s]
    upper_fm = jnp.abs(jax.random.normal(ku, (dim_io, batch), jnp.float32))   # [R; S]
    bounds_fm = jnp.concatenate((lower_fm, upper_fm), axis=0)                 # (8, B)

    beta_fm = model_constant_forward_fm(x_fm, bounds_fm, params)
    jax.block_until_ready(beta_fm)

    # Reference in plain JAX: same f32 layer-1 / bf16 MXU / f32-accumulate math.
    w1, b1, w2, b2, w3, b3, w4, b4 = params
    h = jnp.maximum(jnp.dot(w1, x_fm) + b1, 0.0)
    h = jnp.maximum(jnp.dot(w2, h.astype(jnp.bfloat16),
                            preferred_element_type=jnp.float32) + b2, 0.0)
    h = jnp.maximum(jnp.dot(w3, h.astype(jnp.bfloat16),
                            preferred_element_type=jnp.float32) + b3, 0.0)
    y = jnp.dot(w4, h.astype(jnp.bfloat16),
                preferred_element_type=jnp.float32) + b4
    ref_fm = jnp.maximum(lower_fm, jnp.minimum(upper_fm, y))                  # f32

    assert beta_fm.shape == (dim_io, batch) and beta_fm.dtype == jnp.bfloat16
    assert jnp.allclose(beta_fm.astype(jnp.float32), ref_fm, atol=2e-2, rtol=2e-2)

    # Module-convention adapter (x, r, R, s, S) -> (B, dim_io); layout plumbing only.
    r_b, s_b = lower_fm[:dim_y].T, lower_fm[dim_y:].T
    R_b, S_b = upper_fm[:dim_y].T, upper_fm[dim_y:].T
    beta_bm = model_constant_forward(x_fm.T, r_b, R_b, s_b, S_b, params)
    jax.block_until_ready(beta_bm)
    assert beta_bm.shape == (batch, dim_io)
    assert jnp.allclose(beta_bm.astype(jnp.float32), ref_fm.T, atol=2e-2, rtol=2e-2)

    # TODO(synk): for the BSDE loop, stack multiple time-step evaluations along
    # the lane (batch) axis into one pallas_call (or fuse this MLP+clamp into
    # the surrounding BSDE-step kernel) -- each call here is launch-overhead bound.
    print("KERNEL_OK")
</pallas_src>

<mosaic_0001>
module attributes {stable_mosaic.version = 11 : i64} {
  func.func @_mlp_clamp_kernel(%arg0: i32, %arg1: memref<4x256xf32, #tpu.memory_space<vmem>>, %arg2: memref<8x256xf32, #tpu.memory_space<vmem>>, %arg3: memref<32x4xf32, #tpu.memory_space<vmem>>, %arg4: memref<32x1xf32, #tpu.memory_space<vmem>>, %arg5: memref<32x32xbf16, #tpu.memory_space<vmem>>, %arg6: memref<32x1xf32, #tpu.memory_space<vmem>>, %arg7: memref<32x32xbf16, #tpu.memory_space<vmem>>, %arg8: memref<32x1xf32, #tpu.memory_space<vmem>>, %arg9: memref<4x32xbf16, #tpu.memory_space<vmem>>, %arg10: memref<4x1xf32, #tpu.memory_space<vmem>>, %arg11: memref<4x256xbf16, #tpu.memory_space<vmem>>) attributes {dimension_semantics = [#tpu.dimension_semantics<parallel>], iteration_bounds = array<i64: 1>, scalar_prefetch = 0 : i64, scratch_operands = 0 : i64, tpu.core_type = #tpu.core_type<tc>, window_params = [{transform_indices = @transform_0, window_bounds = array<i64: 4, 256>}, {transform_indices = @transform_1, window_bounds = array<i64: 8, 256>}, {pipeline_mode = #tpu.pipeline_mode<synchronous>, transform_indices = @transform_2, window_bounds = array<i64: 32, 4>}, {pipeline_mode = #tpu.pipeline_mode<synchronous>, transform_indices = @transform_3, window_bounds = array<i64: 32, 1>}, {pipeline_mode = #tpu.pipeline_mode<synchronous>, transform_indices = @transform_4, window_bounds = array<i64: 32, 32>}, {pipeline_mode = #tpu.pipeline_mode<synchronous>, transform_indices = @transform_5, window_bounds = array<i64: 32, 1>}, {pipeline_mode = #tpu.pipeline_mode<synchronous>, transform_indices = @transform_6, window_bounds = array<i64: 32, 32>}, {pipeline_mode = #tpu.pipeline_mode<synchronous>, transform_indices = @transform_7, window_bounds = array<i64: 32, 1>}, {pipeline_mode = #tpu.pipeline_mode<synchronous>, transform_indices = @transform_8, window_bounds = array<i64: 4, 32>}, {pipeline_mode = #tpu.pipeline_mode<synchronous>, transform_indices = @transform_9, window_bounds = array<i64: 4, 1>}, {transform_indices = @transform_10, window_bounds = array<i64: 4, 256>}]} {
    %c0 = arith.constant 0 : index
    %c0_0 = arith.constant 0 : index
    %0 = vector.load %arg1[%c0, %c0_0] : memref<4x256xf32, #tpu.memory_space<vmem>>, vector<4x256xf32>
    %c0_1 = arith.constant 0 : index
    %c0_2 = arith.constant 0 : index
    %1 = vector.load %arg3[%c0_1, %c0_2] : memref<32x4xf32, #tpu.memory_space<vmem>>, vector<32x4xf32>
    %c0_3 = arith.constant 0 : index
    %c0_4 = arith.constant 0 : index
    %2 = vector.load %arg4[%c0_3, %c0_4] : memref<32x1xf32, #tpu.memory_space<vmem>>, vector<32x1xf32>
    %3 = vector.extract_strided_slice %1 {offsets = [0, 0], sizes = [32, 1], strides = [1, 1]} : vector<32x4xf32> to vector<32x1xf32>
    %4 = vector.extract_strided_slice %0 {offsets = [0, 0], sizes = [1, 256], strides = [1, 1]} : vector<4x256xf32> to vector<1x256xf32>
    %5 = vector.broadcast %3 : vector<32x1xf32> to vector<32x256xf32>
    %6 = vector.broadcast %4 : vector<1x256xf32> to vector<32x256xf32>
    %7 = arith.mulf %5, %6 : vector<32x256xf32>
    %8 = vector.broadcast %2 : vector<32x1xf32> to vector<32x256xf32>
    %9 = arith.addf %8, %7 : vector<32x256xf32>
    %10 = vector.extract_strided_slice %1 {offsets = [0, 1], sizes = [32, 1], strides = [1, 1]} : vector<32x4xf32> to vector<32x1xf32>
    %11 = vector.extract_strided_slice %0 {offsets = [1, 0], sizes = [1, 256], strides = [1, 1]} : vector<4x256xf32> to vector<1x256xf32>
    %12 = vector.broadcast %10 : vector<32x1xf32> to vector<32x256xf32>
    %13 = vector.broadcast %11 : vector<1x256xf32> to vector<32x256xf32>
    %14 = arith.mulf %12, %13 : vector<32x256xf32>
    %15 = arith.addf %9, %14 : vector<32x256xf32>
    %16 = vector.extract_strided_slice %1 {offsets = [0, 2], sizes = [32, 1], strides = [1, 1]} : vector<32x4xf32> to vector<32x1xf32>
    %17 = vector.extract_strided_slice %0 {offsets = [2, 0], sizes = [1, 256], strides = [1, 1]} : vector<4x256xf32> to vector<1x256xf32>
    %18 = vector.broadcast %16 : vector<32x1xf32> to vector<32x256xf32>
    %19 = vector.broadcast %17 : vector<1x256xf32> to vector<32x256xf32>
    %20 = arith.mulf %18, %19 : vector<32x256xf32>
    %21 = arith.addf %15, %20 : vector<32x256xf32>
    %22 = vector.extract_strided_slice %1 {offsets = [0, 3], sizes = [32, 1], strides = [1, 1]} : vector<32x4xf32> to vector<32x1xf32>
    %23 = vector.extract_strided_slice %0 {offsets = [3, 0], sizes = [1, 256], strides = [1, 1]} : vector<4x256xf32> to vector<1x256xf32>
    %24 = vector.broadcast %22 : vector<32x1xf32> to vector<32x256xf32>
    %25 = vector.broadcast %23 : vector<1x256xf32> to vector<32x256xf32>
    %26 = arith.mulf %24, %25 : vector<32x256xf32>
    %27 = arith.addf %21, %26 : vector<32x256xf32>
    %cst = arith.constant 0.000000e+00 : f32
    %28 = vector.broadcast %cst : f32 to vector<32x256xf32>
    %29 = arith.maximumf %27, %28 : vector<32x256xf32>
    %c0_5 = arith.constant 0 : index
    %c0_6 = arith.constant 0 : index
    %30 = vector.load %arg5[%c0_5, %c0_6] : memref<32x32xbf16, #tpu.memory_space<vmem>>, vector<32x32xbf16>
    %31 = arith.truncf %29 : vector<32x256xf32> to vector<32x256xbf16>
    %cst_7 = arith.constant dense<0.000000e+00> : vector<32x256xf32>
    %32 = tpu.matmul %30, %31, %cst_7 {dimension_numbers = #tpu.dot_dimension_numbers<[1], [0], [0], [1], [0, 0, 1, 1], [], []>} : vector<32x32xbf16>, vector<32x256xbf16>, vector<32x256xf32> -> vector<32x256xf32>
    %c0_8 = arith.constant 0 : index
    %c0_9 = arith.constant 0 : index
    %33 = vector.load %arg6[%c0_8, %c0_9] : memref<32x1xf32, #tpu.memory_space<vmem>>, vector<32x1xf32>
    %34 = vector.broadcast %33 : vector<32x1xf32> to vector<32x256xf32>
    %35 = arith.addf %32, %34 : vector<32x256xf32>
    %cst_10 = arith.constant 0.000000e+00 : f32
    %36 = vector.broadcast %cst_10 : f32 to vector<32x256xf32>
    %37 = arith.maximumf %35, %36 : vector<32x256xf32>
    %c0_11 = arith.constant 0 : index
    %c0_12 = arith.constant 0 : index
    %38 = vector.load %arg7[%c0_11, %c0_12] : memref<32x32xbf16, #tpu.memory_space<vmem>>, vector<32x32xbf16>
    %39 = arith.truncf %37 : vector<32x256xf32> to vector<32x256xbf16>
    %cst_13 = arith.constant dense<0.000000e+00> : vector<32x256xf32>
    %40 = tpu.matmul %38, %39, %cst_13 {dimension_numbers = #tpu.dot_dimension_numbers<[1], [0], [0], [1], [0, 0, 1, 1], [], []>} : vector<32x32xbf16>, vector<32x256xbf16>, vector<32x256xf32> -> vector<32x256xf32>
    %c0_14 = arith.constant 0 : index
    %c0_15 = arith.constant 0 : index
    %41 = vector.load %arg8[%c0_14, %c0_15] : memref<32x1xf32, #tpu.memory_space<vmem>>, vector<32x1xf32>
    %42 = vector.broadcast %41 : vector<32x1xf32> to vector<32x256xf32>
    %43 = arith.addf %40, %42 : vector<32x256xf32>
    %cst_16 = arith.constant 0.000000e+00 : f32
    %44 = vector.broadcast %cst_16 : f32 to vector<32x256xf32>
    %45 = arith.maximumf %43, %44 : vector<32x256xf32>
    %c0_17 = arith.constant 0 : index
    %c0_18 = arith.constant 0 : index
    %46 = vector.load %arg9[%c0_17, %c0_18] : memref<4x32xbf16, #tpu.memory_space<vmem>>, vector<4x32xbf16>
    %47 = arith.truncf %45 : vector<32x256xf32> to vector<32x256xbf16>
    %cst_19 = arith.constant dense<0.000000e+00> : vector<4x256xf32>
    %48 = tpu.matmul %46, %47, %cst_19 {dimension_numbers = #tpu.dot_dimension_numbers<[1], [0], [0], [1], [0, 0, 1, 1], [], []>} : vector<4x32xbf16>, vector<32x256xbf16>, vector<4x256xf32> -> vector<4x256xf32>
    %c0_20 = arith.constant 0 : index
    %c0_21 = arith.constant 0 : index
    %49 = vector.load %arg10[%c0_20, %c0_21] : memref<4x1xf32, #tpu.memory_space<vmem>>, vector<4x1xf32>
    %50 = vector.broadcast %49 : vector<4x1xf32> to vector<4x256xf32>
    %51 = arith.addf %48, %50 : vector<4x256xf32>
    %c0_22 = arith.constant 0 : index
    %c0_23 = arith.constant 0 : index
    %52 = vector.load %arg2[%c0_22, %c0_23] : memref<8x256xf32, #tpu.memory_space<vmem>>, vector<4x256xf32>
    %c4 = arith.constant 4 : index
    %c0_24 = arith.constant 0 : index
    %53 = vector.load %arg2[%c4, %c0_24] : memref<8x256xf32, #tpu.memory_space<vmem>>, vector<4x256xf32>
    %54 = arith.minimumf %53, %51 : vector<4x256xf32>
    %55 = arith.maximumf %52, %54 : vector<4x256xf32>
    %56 = arith.truncf %55 : vector<4x256xf32> to vector<4x256xbf16>
    %c0_25 = arith.constant 0 : index
    %c0_26 = arith.constant 0 : index
    %57 = vector.load %arg11[%c0_25, %c0_26] : memref<4x256xbf16, #tpu.memory_space<vmem>>, vector<4x256xbf16>
    tpu.vector_store %arg11[%c0_25, %c0_26], %56 {strides = array<i32>} : memref<4x256xbf16, #tpu.memory_space<vmem>>, vector<4x256xbf16>,
    return
  }
  func.func @transform_0(%arg0: i32) -> (i32, i32) {
    %c0_i32 = arith.constant 0 : i32
    %c0_i32_0 = arith.constant 0 : i32
    return %c0_i32, %arg0 : i32, i32
  }
  func.func @transform_1(%arg0: i32) -> (i32, i32) {
    %c0_i32 = arith.constant 0 : i32
    %c0_i32_0 = arith.constant 0 : i32
    return %c0_i32, %arg0 : i32, i32
  }
  func.func @transform_2(%arg0: i32) -> (i32, i32) {
    %c0_i32 = arith.constant 0 : i32
    %c0_i32_0 = arith.constant 0 : i32
    %c0_i32_1 = arith.constant 0 : i32
    return %c0_i32, %c0_i32_0 : i32, i32
  }
  func.func @transform_3(%arg0: i32) -> (i32, i32) {
    %c0_i32 = arith.constant 0 : i32
    %c0_i32_0 = arith.constant 0 : i32
    %c0_i32_1 = arith.constant 0 : i32
    return %c0_i32, %c0_i32_0 : i32, i32
  }
  func.func @transform_4(%arg0: i32) -> (i32, i32) {
    %c0_i32 = arith.constant 0 : i32
    %c0_i32_0 = arith.constant 0 : i32
    %c0_i32_1 = arith.constant 0 : i32
    return %c0_i32, %c0_i32_0 : i32, i32
  }
  func.func @transform_5(%arg0: i32) -> (i32, i32) {
    %c0_i32 = arith.constant 0 : i32
    %c0_i32_0 = arith.constant 0 : i32
    %c0_i32_1 = arith.constant 0 : i32
    return %c0_i32, %c0_i32_0 : i32, i32
  }
  func.func @transform_6(%arg0: i32) -> (i32, i32) {
    %c0_i32 = arith.constant 0 : i32
    %c0_i32_0 = arith.constant 0 : i32
    %c0_i32_1 = arith.constant 0 : i32
    return %c0_i32, %c0_i32_0 : i32, i32
  }
  func.func @transform_7(%arg0: i32) -> (i32, i32) {
    %c0_i32 = arith.constant 0 : i32
    %c0_i32_0 = arith.constant 0 : i32
    %c0_i32_1 = arith.constant 0 : i32
    return %c0_i32, %c0_i32_0 : i32, i32
  }
  func.func @transform_8(%arg0: i32) -> (i32, i32) {
    %c0_i32 = arith.constant 0 : i32
    %c0_i32_0 = arith.constant 0 : i32
    %c0_i32_1 = arith.constant 0 : i32
    return %c0_i32, %c0_i32_0 : i32, i32
  }
  func.func @transform_9(%arg0: i32) -> (i32, i32) {
    %c0_i32 = arith.constant 0 : i32
    %c0_i32_0 = arith.constant 0 : i32
    %c0_i32_1 = arith.constant 0 : i32
    return %c0_i32, %c0_i32_0 : i32, i32
  }
  func.func @transform_10(%arg0: i32) -> (i32, i32) {
    %c0_i32 = arith.constant 0 : i32
    %c0_i32_0 = arith.constant 0 : i32
    return %c0_i32, %arg0 : i32, i32
  }
}

</mosaic_0001>

<llo_original>
// kernel: tpu_custom_call.1
$region0: #{tpu_custom_call.1}
  #allocation0 [shape = 'u32[]', space=smem, size = 0x4, offset = 0x4, fixed_abs, tag = 'smem constant byte address 0x4 - core index']
  #allocation1 [shape = 'u32[144,128]{1,0:T(1,128)}', space=vmem, size = 0x12000, scoped, tag = 'internal scratch']
  %s0 = inlined_call_operand.vmem [shape: f32[4,256], index: 0, kind: input, shape index: {}]
  %s1 = inlined_call_operand.vmem [shape: f32[8,256], index: 1, kind: input, shape index: {}]
  %s2 = inlined_call_operand.vmem [shape: f32[32,4], index: 2, kind: input, shape index: {}]
  %s3 = inlined_call_operand.vmem [shape: f32[32,1], index: 3, kind: input, shape index: {}]
  %s4 = inlined_call_operand.vmem [shape: bf16[32,32], index: 4, kind: input, shape index: {}]
  %s5 = inlined_call_operand.vmem [shape: f32[32,1], index: 5, kind: input, shape index: {}]
  %s6 = inlined_call_operand.vmem [shape: bf16[32,32], index: 6, kind: input, shape index: {}]
  %s7 = inlined_call_operand.vmem [shape: f32[32,1], index: 7, kind: input, shape index: {}]
  %s8 = inlined_call_operand.vmem [shape: bf16[4,32], index: 8, kind: input, shape index: {}]
  %s9 = inlined_call_operand.vmem [shape: f32[4,1], index: 9, kind: input, shape index: {}]
  %s10 = inlined_call_operand.hbm [shape: bf16[4,256], index: 10, kind: output, shape index: {}]
  %s11 = sld [smem:[#allocation0]]
  $region50: #{tpu_custom_call.1} parent=0
    _
  %s13 = ssub.s32 1, %s11
  %s14 = scalar_select 0, %s13, %s11
  $region1: #{tpu_custom_call.1} parent=0
    #allocation2 [shape = 'u8[2048]{0}', space=vmem, size = 0x800, scoped, tag = 'output window, operand 0, single buffered']
    #allocation3 [shape = 's32[1]{0}', space=sflag, size = 0x4, scoped, tag = 'scoped memory for tpu_custom_call.1']
    %15 = vsyncpa [#allocation3], 0
    // Predicated region
    $region2: #{tpu_custom_call.1} parent=1 // pred_check
      _
    $region3: #{tpu_custom_call.1} parent=1 // pred_check_branch
      %17 = sbr.rel (0) target = $region5
    $region4: #{tpu_custom_call.1} parent=1 // pred_region
      _
    $region5: #{tpu_custom_call.1} parent=1 // pred_fallthru
      _
    // Predicated region
    $region6: #{tpu_custom_call.1} parent=1 // pred_check
      _
    $region7: #{tpu_custom_call.1} parent=1 // pred_check_branch
      %19 = sbr.rel (0) target = $region9
    $region8: #{tpu_custom_call.1} parent=1 // pred_region
      _
    $region9: #{tpu_custom_call.1} parent=1 // pred_fallthru
      _
    // Predicated region
    $region10: #{tpu_custom_call.1} parent=1 // pred_check
      _
    $region11: #{tpu_custom_call.1} parent=1 // pred_check_branch
      %21 = sbr.rel (0) target = $region13
    $region12: #{tpu_custom_call.1} parent=1 // pred_region
      _
    $region13: #{tpu_custom_call.1} parent=1 // pred_fallthru
      _
    // Predicated region
    $region14: #{tpu_custom_call.1} parent=1 // pred_check
      _
    $region15: #{tpu_custom_call.1} parent=1 // pred_check_branch
      %23 = sbr.rel (0) target = $region17
    $region16: #{tpu_custom_call.1} parent=1 // pred_region
      _
    $region17: #{tpu_custom_call.1} parent=1 // pred_fallthru
      _
    // Predicated region
    $region18: #{tpu_custom_call.1} parent=1 // pred_check
      _
    $region19: #{tpu_custom_call.1} parent=1 // pred_check_branch
      %25 = sbr.rel (0) target = $region21
    $region20: #{tpu_custom_call.1} parent=1 // pred_region
      _
    $region21: #{tpu_custom_call.1} parent=1 // pred_fallthru
      _
    // Predicated region
    $region22: #{tpu_custom_call.1} parent=1 // pred_check
      _
    $region23: #{tpu_custom_call.1} parent=1 // pred_check_branch
      %27 = sbr.rel (0) target = $region25
    $region24: #{tpu_custom_call.1} parent=1 // pred_region
      _
    $region25: #{tpu_custom_call.1} parent=1 // pred_fallthru
      _
    // Predicated region
    $region26: #{tpu_custom_call.1} parent=1 // pred_check
      _
    $region27: #{tpu_custom_call.1} parent=1 // pred_check_branch
      %29 = sbr.rel (0) target = $region29
    $region28: #{tpu_custom_call.1} parent=1 // pred_region
      _
    $region29: #{tpu_custom_call.1} parent=1 // pred_fallthru
      _
    // Predicated region
    $region30: #{tpu_custom_call.1} parent=1 // pred_check
      _
    $region31: #{tpu_custom_call.1} parent=1 // pred_check_branch
      %31 = sbr.rel (0) target = $region33
    $region32: #{tpu_custom_call.1} parent=1 // pred_region
      _
    $region33: #{tpu_custom_call.1} parent=1 // pred_fallthru
      _
    // Predicated region
    $region34: #{tpu_custom_call.1} parent=1 // pred_check
      _
    $region35: #{tpu_custom_call.1} parent=1 // pred_check_branch
      %33 = sbr.rel (0) target = $region37
    $region36: #{tpu_custom_call.1} parent=1 // pred_region
      _
    $region37: #{tpu_custom_call.1} parent=1 // pred_fallthru
      _
    // Predicated region
    $region38: #{tpu_custom_call.1} parent=1 // pred_check
      _
    $region39: #{tpu_custom_call.1} parent=1 // pred_check_branch
      %35 = sbr.rel (0) target = $region41
    $region40: #{tpu_custom_call.1} parent=1 // pred_region
      _
    $region41: #{tpu_custom_call.1} parent=1 // pred_fallthru
      _
    %v37 = vld [vmem:[%s0] sm:$0xff]
    %v38 = vld [vmem:[%s2] sm:$0xff]
    %v39 = vld [vmem:[%s2 + $0x8] sm:$0xff]
    %v40 = vld [vmem:[%s2 + $0x10] sm:$0xff]
    %v41 = vld [vmem:[%s2 + $0x18] sm:$0xff]
    %v42 = vld [vmem:[%s3] sm:$0xff]
    %v43 = vld [vmem:[%s3 + $0x8] sm:$0xff]
    %v44 = vld [vmem:[%s3 + $0x10] sm:$0xff]
    %v45 = vld [vmem:[%s3 + $0x18] sm:$0xff]
    %47 = vset.pattern.permute.xlu0 0
    %48 = vperm.xlu0 %47, %v38
    %v49 = vpop.permute.xlu0 %48
    %52 = vset.pattern.permute.xlu0 0
    %53 = vperm.xlu0 %52, %v39
    %v54 = vpop.permute.xlu0 %53
    %57 = vset.pattern.permute.xlu0 0
    %58 = vperm.xlu0 %57, %v40
    %v59 = vpop.permute.xlu0 %58
    %62 = vset.pattern.permute.xlu0 0
    %63 = vperm.xlu0 %62, %v41
    %v64 = vpop.permute.xlu0 %63
    %v67 = vlaneseq
    %v68 = vshrl.u32 %v67, 7
    %v69 = vsub.s32 0, %v68
    %v70 = vrot.slane %v37, %v69
    %v71 = vlaneseq
    %v72 = vshrl.u32 %v71, 7
    %v73 = vsub.s32 4, %v72
    %v74 = vrot.slane %v37, %v73
    %v77 = vlaneseq
    %v78 = vshrl.u32 %v77, 7
    %v79 = vsub.s32 0, %v78
    %v80 = vrot.slane %v70, %v79
    %v81 = vlaneseq
    %v82 = vshrl.u32 %v81, 7
    %v83 = vsub.s32 0, %v82
    %v84 = vrot.slane %v74, %v83
    %v85 = vmul.f32 %v49, %v80
    %v86 = vmul.f32 %v49, %v84
    %v87 = vmul.f32 %v54, %v80
    %v88 = vmul.f32 %v54, %v84
    %v89 = vmul.f32 %v59, %v80
    %v90 = vmul.f32 %v59, %v84
    %v91 = vmul.f32 %v64, %v80
    %v92 = vmul.f32 %v64, %v84
    %94 = vset.pattern.permute.xlu0 0
    %95 = vperm.xlu0 %94, %v42
    %v96 = vpop.permute.xlu0 %95
    %99 = vset.pattern.permute.xlu0 0
    %100 = vperm.xlu0 %99, %v43
    %v101 = vpop.permute.xlu0 %100
    %104 = vset.pattern.permute.xlu0 0
    %105 = vperm.xlu0 %104, %v44
    %v106 = vpop.permute.xlu0 %105
    %109 = vset.pattern.permute.xlu0 0
    %110 = vperm.xlu0 %109, %v45
    %v111 = vpop.permute.xlu0 %110
    %v113 = vadd.f32 %v96, %v85
    %v114 = vadd.f32 %v96, %v86
    %v115 = vadd.f32 %v101, %v87
    %v116 = vadd.f32 %v101, %v88
    %v117 = vadd.f32 %v106, %v89
    %v118 = vadd.f32 %v106, %v90
    %v119 = vadd.f32 %v111, %v91
    %v120 = vadd.f32 %v111, %v92
    %121 = vset.pattern.permute.xlu0 1
    %122 = vperm.xlu0 %121, %v38
    %v123 = vpop.permute.xlu0 %122
    %125 = vset.pattern.permute.xlu0 1
    %126 = vperm.xlu0 %125, %v39
    %v127 = vpop.permute.xlu0 %126
    %129 = vset.pattern.permute.xlu0 1
    %130 = vperm.xlu0 %129, %v40
    %v131 = vpop.permute.xlu0 %130
    %133 = vset.pattern.permute.xlu0 1
    %134 = vperm.xlu0 %133, %v41
    %v135 = vpop.permute.xlu0 %134
    %v137 = vlaneseq
    %v138 = vshrl.u32 %v137, 7
    %v139 = vsub.s32 1, %v138
    %v140 = vrot.slane %v37, %v139
    %v141 = vlaneseq
    %v142 = vshrl.u32 %v141, 7
    %v143 = vsub.s32 5, %v142
    %v144 = vrot.slane %v37, %v143
    %v147 = vlaneseq
    %v148 = vshrl.u32 %v147, 7
    %v149 = vsub.s32 1, %v148
    %v150 = vrot.slane %v140, %v149
    %v151 = vlaneseq
    %v152 = vshrl.u32 %v151, 7
    %v153 = vsub.s32 1, %v152
    %v154 = vrot.slane %v144, %v153
    %v155 = vmul.f32 %v123, %v150
    %v156 = vmul.f32 %v123, %v154
    %v157 = vmul.f32 %v127, %v150
    %v158 = vmul.f32 %v127, %v154
    %v159 = vmul.f32 %v131, %v150
    %v160 = vmul.f32 %v131, %v154
    %v161 = vmul.f32 %v135, %v150
    %v162 = vmul.f32 %v135, %v154
    %v163 = vadd.f32 %v113, %v155
    %v164 = vadd.f32 %v114, %v156
    %v165 = vadd.f32 %v115, %v157
    %v166 = vadd.f32 %v116, %v158
    %v167 = vadd.f32 %v117, %v159
    %v168 = vadd.f32 %v118, %v160
    %v169 = vadd.f32 %v119, %v161
    %v170 = vadd.f32 %v120, %v162
    %171 = vset.pattern.permute.xlu0 2
    %172 = vperm.xlu0 %171, %v38
    %v173 = vpop.permute.xlu0 %172
    %175 = vset.pattern.permute.xlu0 2
    %176 = vperm.xlu0 %175, %v39
    %v177 = vpop.permute.xlu0 %176
    %179 = vset.pattern.permute.xlu0 2
    %180 = vperm.xlu0 %179, %v40
    %v181 = vpop.permute.xlu0 %180
    %183 = vset.pattern.permute.xlu0 2
    %184 = vperm.xlu0 %183, %v41
    %v185 = vpop.permute.xlu0 %184
    %v187 = vlaneseq
    %v188 = vshrl.u32 %v187, 7
    %v189 = vsub.s32 2, %v188
    %v190 = vrot.slane %v37, %v189
    %v191 = vlaneseq
    %v192 = vshrl.u32 %v191, 7
    %v193 = vsub.s32 6, %v192
    %v194 = vrot.slane %v37, %v193
    %v197 = vlaneseq
    %v198 = vshrl.u32 %v197, 7
    %v199 = vsub.s32 2, %v198
    %v200 = vrot.slane %v190, %v199
    %v201 = vlaneseq
    %v202 = vshrl.u32 %v201, 7
    %v203 = vsub.s32 2, %v202
    %v204 = vrot.slane %v194, %v203
    %v205 = vmul.f32 %v173, %v200
    %v206 = vmul.f32 %v173, %v204
    %v207 = vmul.f32 %v177, %v200
    %v208 = vmul.f32 %v177, %v204
    %v209 = vmul.f32 %v181, %v200
    %v210 = vmul.f32 %v181, %v204
    %v211 = vmul.f32 %v185, %v200
    %v212 = vmul.f32 %v185, %v204
    %v213 = vadd.f32 %v163, %v205
    %v214 = vadd.f32 %v164, %v206
    %v215 = vadd.f32 %v165, %v207
    %v216 = vadd.f32 %v166, %v208
    %v217 = vadd.f32 %v167, %v209
    %v218 = vadd.f32 %v168, %v210
    %v219 = vadd.f32 %v169, %v211
    %v220 = vadd.f32 %v170, %v212
    %221 = vset.pattern.permute.xlu0 3
    %222 = vperm.xlu0 %221, %v38
    %v223 = vpop.permute.xlu0 %222
    %225 = vset.pattern.permute.xlu0 3
    %226 = vperm.xlu0 %225, %v39
    %v227 = vpop.permute.xlu0 %226
    %229 = vset.pattern.permute.xlu0 3
    %230 = vperm.xlu0 %229, %v40
    %v231 = vpop.permute.xlu0 %230
    %233 = vset.pattern.permute.xlu0 3
    %234 = vperm.xlu0 %233, %v41
    %v235 = vpop.permute.xlu0 %234
    %v237 = vlaneseq
    %v238 = vshrl.u32 %v237, 7
    %v239 = vsub.s32 3, %v238
    %v240 = vrot.slane %v37, %v239
    %v241 = vlaneseq
    %v242 = vshrl.u32 %v241, 7
    %v243 = vsub.s32 7, %v242
    %v244 = vrot.slane %v37, %v243
    %v247 = vlaneseq
    %v248 = vshrl.u32 %v247, 7
    %v249 = vsub.s32 3, %v248
    %v250 = vrot.slane %v240, %v249
    %v251 = vlaneseq
    %v252 = vshrl.u32 %v251, 7
    %v253 = vsub.s32 3, %v252
    %v254 = vrot.slane %v244, %v253
    %v255 = vmul.f32 %v223, %v250
    %v256 = vmul.f32 %v223, %v254
    %v257 = vmul.f32 %v227, %v250
    %v258 = vmul.f32 %v227, %v254
    %v259 = vmul.f32 %v231, %v250
    %v260 = vmul.f32 %v231, %v254
    %v261 = vmul.f32 %v235, %v250
    %v262 = vmul.f32 %v235, %v254
    %v263 = vadd.f32 %v213, %v255
    %v264 = vadd.f32 %v214, %v256
    %v265 = vadd.f32 %v215, %v257
    %v266 = vadd.f32 %v216, %v258
    %v267 = vadd.f32 %v217, %v259
    %v268 = vadd.f32 %v218, %v260
    %v269 = vadd.f32 %v219, %v261
    %v270 = vadd.f32 %v220, %v262
    %v271 = vmax.f32 %v263, 0.0
    %v272 = vmax.f32 %v264, 0.0
    %v273 = vmax.f32 %v265, 0.0
    %v274 = vmax.f32 %v266, 0.0
    %v275 = vmax.f32 %v267, 0.0
    %v276 = vmax.f32 %v268, 0.0
    %v277 = vmax.f32 %v269, 0.0
    %v278 = vmax.f32 %v270, 0.0
    %v279 = vld [vmem:[%s4] sm:$0xf]
    %v280 = vld [vmem:[%s4 + $0x4] sm:$0xf]
    %v281 = vld [vmem:[%s4 + $0x8] sm:$0xf]
    %v282 = vld [vmem:[%s4 + $0xc] sm:$0xf]
    %v283 = vpack.c.bf16 %v273, %v271
    %v284 = vpack.c.bf16 %v274, %v272
    %v285 = vpack.c.bf16 %v277, %v275
    %v286 = vpack.c.bf16 %v278, %v276
    %v287 = vld [vmem:[%s5] sm:$0xff]
    %v288 = vld [vmem:[%s5 + $0x8] sm:$0xff]
    %v289 = vld [vmem:[%s5 + $0x10] sm:$0xff]
    %v290 = vld [vmem:[%s5 + $0x18] sm:$0xff]
    %292 = vset.pattern.permute.xlu0 0
    %293 = vperm.xlu0 %292, %v287
    %v294 = vpop.permute.xlu0 %293
    %297 = vset.pattern.permute.xlu0 0
    %298 = vperm.xlu0 %297, %v288
    %v299 = vpop.permute.xlu0 %298
    %302 = vset.pattern.permute.xlu0 0
    %303 = vperm.xlu0 %302, %v289
    %v304 = vpop.permute.xlu0 %303
    %307 = vset.pattern.permute.xlu0 0
    %308 = vperm.xlu0 %307, %v290
    %v309 = vpop.permute.xlu0 %308
    %v315 = vunpack.c.l.b16 %v279
    %v316 = vunpack.c.l.b16 %v280
    %v317 = vunpack.c.l.b16 %v281
    %v318 = vunpack.c.l.b16 %v282
    %v319 = vpack.c.b16 %v316, %v315
    %v320 = vpack.c.b16 %v318, %v317
    %vm321 = vcmask 261120
    %v323 = vsel %vm321, %v319, 0
    %v326 = vsel %vm321, %v320, 0
    %328 = vmatprep.subr.bf16.mxu0 %v284
    %329 = vmatpush1.bf16.msra.mxu0 %v283
    %330 = vmatprep.subr.bf16.mxu0 %v286
    %331 = vmatpush1.bf16.msra.mxu0 %v285
    %332 = vmatprep.subr.bf16.mxu0 0
    %333 = vmatpush1.bf16.msra.mxu0 0
    %334 = vmatprep.subr.bf16.mxu0 0
    %335 = vmatpush1.bf16.msra.mxu0 0
    %336 = vmatprep.subr.bf16.mxu0 0
    %337 = vmatpush1.bf16.msra.mxu0 0
    %338 = vmatprep.subr.bf16.mxu0 0
    %339 = vmatpush1.bf16.msra.mxu0 0
    %340 = vmatprep.subr.bf16.mxu0 0
    %341 = vmatpush1.bf16.msra.mxu0 0
    %342 = vmatprep.subr.bf16.mxu0 0
    %343 = vmatpush1.bf16.msra.mxu0 0
    %344 = vmatprep.subr.bf16.mxu0 0
    %345 = vmatpush1.bf16.msra.mxu0 0
    %346 = vmatprep.subr.bf16.mxu0 0
    %347 = vmatpush1.bf16.msra.mxu0 0
    %348 = vmatprep.subr.bf16.mxu0 0
    %349 = vmatpush1.bf16.msra.mxu0 0
    %350 = vmatprep.subr.bf16.mxu0 0
    %351 = vmatpush1.bf16.msra.mxu0 0
    %352 = vmatprep.subr.bf16.mxu0 0
    %353 = vmatpush1.bf16.msra.mxu0 0
    %354 = vmatprep.subr.bf16.mxu0 0
    %355 = vmatpush1.bf16.msra.mxu0 0
    %356 = vmatprep.subr.bf16.mxu0 0
    %357 = vmatpush1.bf16.msra.mxu0 0
    %358 = vmatprep.subr.bf16.mxu0 0
    %359 = vmatpush1.bf16.msra.mxu0 0
    %360 = vmatprep.mubr.bf16.mxu0 0
    %361 = vmatmul.mubr.bf16.gmra.mrb[0].mxu0 %v323
    %v362 = vpop.f32.mrb[0].mxu0
    %v363 = vadd.f32 %v294, %v362
    %v364 = vpop.f32.mrb[0].mxu0
    %v365 = vadd.f32 %v294, %v364
    %v366 = vpop.f32.mrb[0].mxu0
    %v367 = vadd.f32 %v299, %v366
    %v368 = vpop.f32.mrb[0].mxu0
    %v369 = vadd.f32 %v299, %v368
    %370 = vmatprep.mubr.bf16.mxu0 0
    %371 = vmatmul.mubr.bf16.gmra.mrb[0].mxu0 %v326
    %v372 = vpop.f32.mrb[0].mxu0
    %v373 = vadd.f32 %v304, %v372
    %v374 = vpop.f32.mrb[0].mxu0
    %v375 = vadd.f32 %v304, %v374
    %v376 = vpop.f32.mrb[0].mxu0
    %v377 = vadd.f32 %v309, %v376
    %v378 = vpop.f32.mrb[0].mxu0
    %v379 = vadd.f32 %v309, %v378
    %380 = vdwg.mxu0
    %v381 = vmax.f32 %v363, 0.0
    %v382 = vmax.f32 %v365, 0.0
    %v383 = vmax.f32 %v367, 0.0
    %v384 = vmax.f32 %v369, 0.0
    %v385 = vmax.f32 %v373, 0.0
    %v386 = vmax.f32 %v375, 0.0
    %v387 = vmax.f32 %v377, 0.0
    %v388 = vmax.f32 %v379, 0.0
    %v389 = vld [vmem:[%s6] sm:$0xf]
    %v390 = vld [vmem:[%s6 + $0x4] sm:$0xf]
    %v391 = vld [vmem:[%s6 + $0x8] sm:$0xf]
    %v392 = vld [vmem:[%s6 + $0xc] sm:$0xf]
    %v393 = vpack.c.bf16 %v383, %v381
    %v394 = vpack.c.bf16 %v384, %v382
    %v395 = vpack.c.bf16 %v387, %v385
    %v396 = vpack.c.bf16 %v388, %v386
    %v397 = vld [vmem:[%s7] sm:$0xff]
    %v398 = vld [vmem:[%s7 + $0x8] sm:$0xff]
    %v399 = vld [vmem:[%s7 + $0x10] sm:$0xff]
    %v400 = vld [vmem:[%s7 + $0x18] sm:$0xff]
    %402 = vset.pattern.permute.xlu0 0
    %403 = vperm.xlu0 %402, %v397
    %v404 = vpop.permute.xlu0 %403
    %407 = vset.pattern.permute.xlu0 0
    %408 = vperm.xlu0 %407, %v398
    %v409 = vpop.permute.xlu0 %408
    %412 = vset.pattern.permute.xlu0 0
    %413 = vperm.xlu0 %412, %v399
    %v414 = vpop.permute.xlu0 %413
    %417 = vset.pattern.permute.xlu0 0
    %418 = vperm.xlu0 %417, %v400
    %v419 = vpop.permute.xlu0 %418
    %v425 = vunpack.c.l.b16 %v389
    %v426 = vunpack.c.l.b16 %v390
    %v427 = vunpack.c.l.b16 %v391
    %v428 = vunpack.c.l.b16 %v392
    %v429 = vpack.c.b16 %v426, %v425
    %v430 = vpack.c.b16 %v428, %v427
    %v432 = vsel %vm321, %v429, 0
    %v435 = vsel %vm321, %v430, 0
    %437 = vmatprep.subr.bf16.mxu0 %v394
    %438 = vmatpush1.bf16.msra.mxu0 %v393
    %439 = vmatprep.subr.bf16.mxu0 %v396
    %440 = vmatpush1.bf16.msra.mxu0 %v395
    %441 = vmatprep.subr.bf16.mxu0 0
    %442 = vmatpush1.bf16.msra.mxu0 0
    %443 = vmatprep.subr.bf16.mxu0 0
    %444 = vmatpush1.bf16.msra.mxu0 0
    %445 = vmatprep.subr.bf16.mxu0 0
    %446 = vmatpush1.bf16.msra.mxu0 0
    %447 = vmatprep.subr.bf16.mxu0 0
    %448 = vmatpush1.bf16.msra.mxu0 0
    %449 = vmatprep.subr.bf16.mxu0 0
    %450 = vmatpush1.bf16.msra.mxu0 0
    %451 = vmatprep.subr.bf16.mxu0 0
    %452 = vmatpush1.bf16.msra.mxu0 0
    %453 = vmatprep.subr.bf16.mxu0 0
    %454 = vmatpush1.bf16.msra.mxu0 0
    %455 = vmatprep.subr.bf16.mxu0 0
    %456 = vmatpush1.bf16.msra.mxu0 0
    %457 = vmatprep.subr.bf16.mxu0 0
    %458 = vmatpush1.bf16.msra.mxu0 0
    %459 = vmatprep.subr.bf16.mxu0 0
    %460 = vmatpush1.bf16.msra.mxu0 0
    %461 = vmatprep.subr.bf16.mxu0 0
    %462 = vmatpush1.bf16.msra.mxu0 0
    %463 = vmatprep.subr.bf16.mxu0 0
    %464 = vmatpush1.bf16.msra.mxu0 0
    %465 = vmatprep.subr.bf16.mxu0 0
    %466 = vmatpush1.bf16.msra.mxu0 0
    %467 = vmatprep.subr.bf16.mxu0 0
    %468 = vmatpush1.bf16.msra.mxu0 0
    %469 = vmatprep.mubr.bf16.mxu0 0
    %470 = vmatmul.mubr.bf16.gmra.mrb[0].mxu0 %v432
    %v471 = vpop.f32.mrb[0].mxu0
    %v472 = vadd.f32 %v404, %v471
    %v473 = vpop.f32.mrb[0].mxu0
    %v474 = vadd.f32 %v404, %v473
    %v475 = vpop.f32.mrb[0].mxu0
    %v476 = vadd.f32 %v409, %v475
    %v477 = vpop.f32.mrb[0].mxu0
    %v478 = vadd.f32 %v409, %v477
    %479 = vmatprep.mubr.bf16.mxu0 0
    %480 = vmatmul.mubr.bf16.gmra.mrb[0].mxu0 %v435
    %v481 = vpop.f32.mrb[0].mxu0
    %v482 = vadd.f32 %v414, %v481
    %v483 = vpop.f32.mrb[0].mxu0
    %v484 = vadd.f32 %v414, %v483
    %v485 = vpop.f32.mrb[0].mxu0
    %v486 = vadd.f32 %v419, %v485
    %v487 = vpop.f32.mrb[0].mxu0
    %v488 = vadd.f32 %v419, %v487
    %489 = vdwg.mxu0
    %v490 = vmax.f32 %v472, 0.0
    %v491 = vmax.f32 %v474, 0.0
    %v492 = vmax.f32 %v476, 0.0
    %v493 = vmax.f32 %v478, 0.0
    %v494 = vmax.f32 %v482, 0.0
    %v495 = vmax.f32 %v484, 0.0
    %v496 = vmax.f32 %v486, 0.0
    %v497 = vmax.f32 %v488, 0.0
    %v498 = vld [vmem:[%s8] sm:$0x3]
    %v499 = vpack.c.bf16 %v492, %v490
    %v500 = vpack.c.bf16 %v493, %v491
    %v501 = vpack.c.bf16 %v496, %v494
    %v502 = vpack.c.bf16 %v497, %v495
    %v503 = vld [vmem:[%s9] sm:$0xf]
    %505 = vset.pattern.permute.xlu0 0
    %506 = vperm.xlu0 %505, %v503
    %v507 = vpop.permute.xlu0 %506
    %v510 = vsel %vm321, %v498, 0
    %512 = vmatprep.subr.bf16.mxu0 %v500
    %513 = vmatpush1.bf16.msra.mxu0 %v499
    %514 = vmatprep.subr.bf16.mxu0 %v502
    %515 = vmatpush1.bf16.msra.mxu0 %v501
    %516 = vmatprep.subr.bf16.mxu0 0
    %517 = vmatpush1.bf16.msra.mxu0 0
    %518 = vmatprep.subr.bf16.mxu0 0
    %519 = vmatpush1.bf16.msra.mxu0 0
    %520 = vmatprep.subr.bf16.mxu0 0
    %521 = vmatpush1.bf16.msra.mxu0 0
    %522 = vmatprep.subr.bf16.mxu0 0
    %523 = vmatpush1.bf16.msra.mxu0 0
    %524 = vmatprep.subr.bf16.mxu0 0
    %525 = vmatpush1.bf16.msra.mxu0 0
    %526 = vmatprep.subr.bf16.mxu0 0
    %527 = vmatpush1.bf16.msra.mxu0 0
    %528 = vmatprep.subr.bf16.mxu0 0
    %529 = vmatpush1.bf16.msra.mxu0 0
    %530 = vmatprep.subr.bf16.mxu0 0
    %531 = vmatpush1.bf16.msra.mxu0 0
    %532 = vmatprep.subr.bf16.mxu0 0
    %533 = vmatpush1.bf16.msra.mxu0 0
    %534 = vmatprep.subr.bf16.mxu0 0
    %535 = vmatpush1.bf16.msra.mxu0 0
    %536 = vmatprep.subr.bf16.mxu0 0
    %537 = vmatpush1.bf16.msra.mxu0 0
    %538 = vmatprep.subr.bf16.mxu0 0
    %539 = vmatpush1.bf16.msra.mxu0 0
    %540 = vmatprep.subr.bf16.mxu0 0
    %541 = vmatpush1.bf16.msra.mxu0 0
    %542 = vmatprep.subr.bf16.mxu0 0
    %543 = vmatpush1.bf16.msra.mxu0 0
    %544 = vmatprep.mubr.bf16.mxu0 0
    %545 = vmatmul.mubr.bf16.gmra.mrb[0].mxu0 %v510
    %v546 = vpop.f32.mrb[0].mxu0
    %v547 = vadd.f32 %v507, %v546
    %v548 = vpop.f32.mrb[0].mxu0
    %v549 = vadd.f32 %v507, %v548
    %v550 = vpop.f32.mrb[0].mxu0
    %v551 = vpop.f32.mrb[0].mxu0
    %552 = vdwg.mxu0
    %v553 = vld [vmem:[%s1] sm:$0xf]
    %v554 = vld [vmem:[%s1 + $0x8] sm:$0xf]
    %v555 = vld [vmem:[%s1] sm:$0xf0]
    %v556 = vld [vmem:[%s1 + $0x8] sm:$0xf0]
    %v559 = vrot.slane %v547, 4
    %v560 = vrot.slane %v549, 4
    %v563 = vmin.f32 %v555, %v559
    %v564 = vmin.f32 %v556, %v560
    %v567 = vrot.slane %v563, 4
    %v568 = vrot.slane %v564, 4
    %v571 = vmax.f32 %v553, %v567
    %v572 = vmax.f32 %v554, %v568
    %v573 = vpack.c.bf16 %v571, %v571
    %v574 = vpack.c.bf16 %v572, %v572
    %v577 = vcombine.low %v573, %v574
    %v579 = vunpack.c.l.s4 1983009808
    %v580 = vunpack.c.0.s8 %v579
    %v581 = vlaneseq
    %v582 = vshrl.u32 %v581, 7
    %v583 = vsub.s32 %v580, %v582
    %v584 = vrot.slane %v577, %v583
    %586 = vst [vmem:[#allocation2] sm:$0xf] %v584
    // Predicated region
    $region42: #{tpu_custom_call.1} parent=1 // pred_check
      _
    $region43: #{tpu_custom_call.1} parent=1 // pred_check_branch
      %588 = sbr.rel (0) target = $region45
    $region44: #{tpu_custom_call.1} parent=1 // pred_region
      %s590 = ssub.s32 64, 64
      %591 = vsyncadd [#allocation3], %s590
      %s593 = sshll.u32 [#allocation2], 4
      %s594 = int_to_ptr.vmem [resolvable:$true] %s593
      %596 = dma.vmem_to_hbm [thread:$0]  %s594, 64, %s10, [#allocation3]
    $region45: #{tpu_custom_call.1} parent=1 // pred_fallthru
      _
    // Predicated region
    $region46: #{tpu_custom_call.1} parent=1 // pred_check
      _
    $region47: #{tpu_custom_call.1} parent=1 // pred_check_branch
      %598 = sbr.rel (0) target = $region49
    $region48: #{tpu_custom_call.1} parent=1 // pred_region
      %599 = dma.done [#allocation3], 64
    $region49: #{tpu_custom_call.1} parent=1 // pred_fallthru
      _
    %600 = vsyncpa [#allocation3], 1

</llo_original>
